<compile_context>
chip_gen: v7x
topology: tpu7x:2x2x1
jax: 0.10.0
libtpu: 0.0.40
codegen_flags: <defaults>
</compile_context>

<pallas_src>
import jax
import jax.numpy as jnp
from jax.experimental import pallas as pl
from jax.experimental.pallas import tpu as pltpu

_BLOCK_BYTES = 8 << 20   # ~8 MiB per block buffer
_VMEM_LIMIT = 48 << 20   # in+out, double-buffered 8 MiB blocks + scratch


def _elementwise_kernel(x_ref, o_ref):
    x = x_ref[...]
    # (((x + 2) - 1) * 3) / 2 ; "* 0.5" is bit-identical to "/ 2" in IEEE fp,
    # so rounding/overflow parity with the PyTorch module is preserved while
    # staying on cheap VPU multiplies (DMA-bound anyway).
    y = (((x + 2.0) - 1.0) * 3.0) * 0.5
    o_ref[...] = y.astype(o_ref.dtype)


def _round_up(a, b):
    return ((a + b - 1) // b) * b


def _sublane_multiple(dtype):
    return {4: 8, 2: 16, 1: 32}.get(jnp.dtype(dtype).itemsize, 8)


def pt_module_forward(x):
    """JAX/Pallas equivalent of PtModule.forward (pure elementwise)."""
    orig_shape = x.shape
    dtype = x.dtype
    total = int(x.size)
    if total == 0:
        return x

    itemsize = jnp.dtype(dtype).itemsize
    sub = _sublane_multiple(dtype)

    # ---- Lane-dense layout, avoiding any pad whenever possible ------------
    ld = None
    for cand in (512, 256, 128):
        if total % cand == 0:
            ld = cand
            break

    xf = x.reshape(-1)
    if ld is None:
        # Ragged element count: pad flat vector to one lane-width only.
        ld = 128
        padded_total = _round_up(total, ld)
        xf = jnp.pad(xf, (0, padded_total - total))
    else:
        padded_total = total
    rows = padded_total // ld
    x2d = xf.reshape(rows, ld)

    # ---- Tile rows: ~8 MiB blocks, sublane-aligned -------------------------
    tr = max(sub, (_BLOCK_BYTES // (ld * itemsize)) // sub * sub)
    if rows <= tr:
        # Single full-array block: legal block shape regardless of alignment,
        # no grid-step tax, no padding needed.
        tr = rows
        grid = (1,)
    else:
        # Block shape stays (8,128)-aligned; Pallas masks the out-of-range
        # tail of the ragged last block, so rows need not be a tile multiple.
        grid = (pl.cdiv(rows, tr),)

    out2d = pl.pallas_call(
        _elementwise_kernel,
        out_shape=jax.ShapeDtypeStruct((rows, ld), dtype),
        grid=grid,
        in_specs=[pl.BlockSpec((tr, ld), lambda i: (i, 0))],
        out_specs=pl.BlockSpec((tr, ld), lambda i: (i, 0)),
        compiler_params=pltpu.CompilerParams(
            # TODO(synk): on v7x, verify both TensorCores stream rows; if not,
            # switch this axis to pltpu.CORE_PARALLEL (or use pl.core_map).
            dimension_semantics=("parallel",),
            vmem_limit_bytes=_VMEM_LIMIT,
        ),
        cost_estimate=pl.CostEstimate(
            flops=3 * total,
            transcendentals=0,
            bytes_accessed=2 * total * itemsize,
        ),
    )(x2d)

    if padded_total != total:
        return out2d.reshape(-1)[:total].reshape(orig_shape)
    return out2d.reshape(orig_shape)


if __name__ == "__main__":
    key = jax.random.PRNGKey(0)
    x = jax.random.normal(key, (2, 4, 16, 16), dtype=jnp.float32)

    out = pt_module_forward(x)
    jax.block_until_ready(out)

    # Reference check against plain JAX with the same op order as PyTorch.
    ref = (((x + 2.0) - 1.0) * 3.0) / 2.0
    assert out.shape == x.shape
    assert jnp.allclose(out, ref, atol=1e-6, rtol=1e-6)

    print("KERNEL_OK")
</pallas_src>

<mosaic_0001>
module attributes {stable_mosaic.version = 11 : i64} {
  func.func @_elementwise_kernel(%arg0: i32, %arg1: memref<4x512xf32, #tpu.memory_space<vmem>>, %arg2: memref<4x512xf32, #tpu.memory_space<vmem>>) attributes {dimension_semantics = [#tpu.dimension_semantics<parallel>], iteration_bounds = array<i64: 1>, scalar_prefetch = 0 : i64, scratch_operands = 0 : i64, tpu.core_type = #tpu.core_type<tc>, window_params = [{transform_indices = @transform_0, window_bounds = array<i64: 4, 512>}, {transform_indices = @transform_1, window_bounds = array<i64: 4, 512>}]} {
    %c0 = arith.constant 0 : index
    %c0_0 = arith.constant 0 : index
    %0 = vector.load %arg1[%c0, %c0_0] : memref<4x512xf32, #tpu.memory_space<vmem>>, vector<4x512xf32>
    %cst = arith.constant 2.000000e+00 : f32
    %1 = vector.broadcast %cst : f32 to vector<4x512xf32>
    %2 = arith.addf %0, %1 : vector<4x512xf32>
    %cst_1 = arith.constant 1.000000e+00 : f32
    %3 = vector.broadcast %cst_1 : f32 to vector<4x512xf32>
    %4 = arith.subf %2, %3 : vector<4x512xf32>
    %cst_2 = arith.constant 3.000000e+00 : f32
    %5 = vector.broadcast %cst_2 : f32 to vector<4x512xf32>
    %6 = arith.mulf %4, %5 : vector<4x512xf32>
    %cst_3 = arith.constant 5.000000e-01 : f32
    %7 = vector.broadcast %cst_3 : f32 to vector<4x512xf32>
    %8 = arith.mulf %6, %7 : vector<4x512xf32>
    %c0_4 = arith.constant 0 : index
    %c0_5 = arith.constant 0 : index
    %9 = vector.load %arg2[%c0_4, %c0_5] : memref<4x512xf32, #tpu.memory_space<vmem>>, vector<4x512xf32>
    tpu.vector_store %arg2[%c0_4, %c0_5], %8 {strides = array<i32>} : memref<4x512xf32, #tpu.memory_space<vmem>>, vector<4x512xf32>,
    return
  }
  func.func @transform_0(%arg0: i32) -> (i32, i32) {
    %c0_i32 = arith.constant 0 : i32
    %c0_i32_0 = arith.constant 0 : i32
    return %arg0, %c0_i32 : i32, i32
  }
  func.func @transform_1(%arg0: i32) -> (i32, i32) {
    %c0_i32 = arith.constant 0 : i32
    %c0_i32_0 = arith.constant 0 : i32
    return %arg0, %c0_i32 : i32, i32
  }
}

</mosaic_0001>

<llo_original>
// kernel: tpu_custom_call.1
$region0: #{tpu_custom_call.1}
  #allocation0 [shape = 'u32[]', space=smem, size = 0x4, offset = 0x4, fixed_abs, tag = 'smem constant byte address 0x4 - core index']
  #allocation1 [shape = 'u32[144,128]{1,0:T(1,128)}', space=vmem, size = 0x12000, scoped, tag = 'internal scratch']
  %s0 = inlined_call_operand.hbm [shape: f32[4,512], index: 0, kind: input, shape index: {}]
  %s1 = inlined_call_operand.hbm [shape: f32[4,512], index: 1, kind: output, shape index: {}]
  %s2 = sld [smem:[#allocation0]]
  $region18: #{tpu_custom_call.1} parent=0
    _
  %s4 = ssub.s32 1, %s2
  %s5 = scalar_select 0, %s4, %s2
  $region1: #{tpu_custom_call.1} parent=0
    #allocation2 [shape = 'u8[8192]{0}', space=vmem, size = 0x2000, scoped, tag = 'input window, operand 0, single buffered']
    #allocation3 [shape = 's32[1]{0}', space=sflag, size = 0x4, scoped, tag = 'scoped memory for tpu_custom_call.1']
    #allocation4 [shape = 's32[1]{0}', space=sflag, size = 0x4, scoped, tag = 'scoped memory for tpu_custom_call.1']
    #allocation5 [shape = 'u8[8192]{0}', space=vmem, size = 0x2000, scoped, tag = 'output window, operand 0, single buffered']
    %6 = vsyncpa [#allocation3], 0
    %7 = vsyncpa [#allocation4], 0
    // Predicated region
    $region2: #{tpu_custom_call.1} parent=1 // pred_check
      _
    $region3: #{tpu_custom_call.1} parent=1 // pred_check_branch
      %9 = sbr.rel (0) target = $region5
    $region4: #{tpu_custom_call.1} parent=1 // pred_region
      %s11 = ssub.s32 256, 256
      %12 = vsyncadd [#allocation3], %s11
      %s14 = sshll.u32 [#allocation2], 4
      %s15 = int_to_ptr.vmem [resolvable:$true] %s14
      %17 = dma.hbm_to_vmem [thread:$0]  %s0, 256, %s15, [#allocation3]
    $region5: #{tpu_custom_call.1} parent=1 // pred_fallthru
      _
    // Predicated region
    $region6: #{tpu_custom_call.1} parent=1 // pred_check
      _
    $region7: #{tpu_custom_call.1} parent=1 // pred_check_branch
      %19 = sbr.rel (0) target = $region9
    $region8: #{tpu_custom_call.1} parent=1 // pred_region
      %20 = dma.done [#allocation3], 256
    $region9: #{tpu_custom_call.1} parent=1 // pred_fallthru
      _
    %v21 = vld [vmem:[#allocation2] sm:$0xff]
    %v22 = vld [vmem:[#allocation2 + $0x8] sm:$0xff]
    %v23 = vadd.f32 %v21, 2.0
    %v24 = vadd.f32 %v22, 2.0
    %v25 = vsub.f32 %v23, 1.0
    %v26 = vsub.f32 %v24, 1.0
    %v27 = vmul.f32 %v25, 3.0
    %v28 = vmul.f32 %v26, 3.0
    %v29 = vmul.f32 %v27, 0.5
    %v30 = vmul.f32 %v28, 0.5
    %31 = vst [vmem:[#allocation5] sm:$0xff] %v29
    %32 = vst [vmem:[#allocation5 + $0x8] sm:$0xff] %v30
    // Predicated region
    $region10: #{tpu_custom_call.1} parent=1 // pred_check
      _
    $region11: #{tpu_custom_call.1} parent=1 // pred_check_branch
      %34 = sbr.rel (0) target = $region13
    $region12: #{tpu_custom_call.1} parent=1 // pred_region
      %s36 = ssub.s32 256, 256
      %37 = vsyncadd [#allocation4], %s36
      %s39 = sshll.u32 [#allocation5], 4
      %s40 = int_to_ptr.vmem [resolvable:$true] %s39
      %42 = dma.vmem_to_hbm [thread:$0]  %s40, 256, %s1, [#allocation4]
    $region13: #{tpu_custom_call.1} parent=1 // pred_fallthru
      _
    // Predicated region
    $region14: #{tpu_custom_call.1} parent=1 // pred_check
      _
    $region15: #{tpu_custom_call.1} parent=1 // pred_check_branch
      %44 = sbr.rel (0) target = $region17
    $region16: #{tpu_custom_call.1} parent=1 // pred_region
      %45 = dma.done [#allocation4], 256
    $region17: #{tpu_custom_call.1} parent=1 // pred_fallthru
      _
    %46 = vsyncpa [#allocation3], 1
    %47 = vsyncpa [#allocation4], 1

</llo_original>
